<compile_context>
chip_gen: v5e
topology: v5e:2x2
jax: 0.10.0
libtpu: 0.0.40
codegen_flags: <defaults>
</compile_context>

<pallas_src>
import functools

import jax
import jax.numpy as jnp
import numpy as np
from jax.experimental import pallas as pl
from jax.experimental.pallas import tpu as pltpu


def _vmem_limit_bytes():
    """Scoped-VMEM budget per generation (v5e/v6e: 128 MiB physical -> ~96 MiB,
    v7x: 64 MiB -> ~48 MiB).  Falls back to a safe value if the query fails."""
    try:
        cap = pltpu.get_tpu_info().vmem_capacity_bytes
    except Exception:  # conservative fallback
        cap = 64 * 1024 * 1024
    return int(min(cap * 3 // 4, 96 * 1024 * 1024))


# ---------------------------------------------------------------------------
# Pallas kernel: whole batch in one invocation.
# ---------------------------------------------------------------------------
def _attention_kernel(x_kq_ref, x_cat_ref,
                      w_kq_ref, b_kq_ref,
                      w_v_ref, b_v_ref,
                      w_rc_ref, b_rc_ref,
                      out_ref, *, batch, seq):
    B, N = batch, seq
    BN = B * N
    C = w_v_ref.shape[0]
    mm = w_kq_ref.dtype                      # MXU operand dtype (f32 or bf16)
    f32 = jnp.float32
    exact = (mm == jnp.float32)

    # ---- Fused K/Q projection (row-major, batch-folded) -------------------
    # One (2*B*N, C) @ (C, C//4) MXU push yields K and Q for every batch
    # element; bias + ReLU stay in f32 (v5e has no bf16 VPU/EUP path).
    kq_proj = jnp.maximum(
        jnp.dot(x_kq_ref[...], w_kq_ref[...], preferred_element_type=f32)
        + b_kq_ref[...], 0.0)                                   # (2BN, C4) f32
    k = kq_proj[:BN]                                            # (BN, C4)  from x_en
    q = kq_proj[BN:]                                            # (BN, C4)  from x_de

    # ---- reduce_channels + Get_V, channel-first (lane-dense, BN lanes) ----
    x_red_t = jnp.maximum(
        jnp.dot(w_rc_ref[...], x_cat_ref[...], preferred_element_type=f32)
        + b_rc_ref[...], 0.0)                                   # (C, BN) f32
    v_t = jnp.maximum(
        jnp.dot(w_v_ref[...], x_red_t.astype(mm), preferred_element_type=f32)
        + b_v_ref[...], 0.0)                                    # (C, BN) f32

    # ---- One block-diagonal (BN, BN) score matrix for the whole batch -----
    # score[i, j] = sum_c K[i, c] * Q[j, c]   (contract last dims, no q.T)
    score = jax.lax.dot_general(
        k.astype(mm), q.astype(mm), (((1,), (1,)), ((), ())),
        preferred_element_type=f32)                             # (BN, BN) f32

    # Per-batch flattened-(N*N) softmax: the (B, N, BN) view groups rows by
    # batch while keeping the 128-wide lane dim intact.  Columns outside a
    # row's own batch block are masked so their exp() contribution is 0.
    score3 = score.reshape(B, N, BN)
    cj = jax.lax.broadcasted_iota(jnp.int32, (1, N, BN), 2)     # column index j
    rb = jax.lax.broadcasted_iota(jnp.int32, (B, 1, 1), 0)      # row-batch id
    lo = rb * N
    in_block = jnp.logical_and(cj >= lo, cj < lo + N)           # (B, N, BN)
    score3 = jnp.where(in_block, score3, -1e30)                 # exp(-1e30) == 0

    m = jnp.max(jnp.max(score3, axis=2, keepdims=True), axis=1, keepdims=True)
    e3 = jnp.exp(score3 - m)                                    # off-block -> 0
    s = jnp.sum(jnp.sum(e3, axis=2, keepdims=True), axis=1, keepdims=True)
    inv_s = (1.0 / s) if exact else pl.reciprocal(s, approx=True)   # EUP slot
    a = (e3 * inv_s).reshape(BN, BN)                            # softmax weights

    # FeatureMap^T[c, i] = sum_j V^T[c, j] * A[i, j]; the zeroed off-diagonal
    # blocks make cross-batch contributions vanish in a single MXU matmul.
    fm_t = jax.lax.dot_general(
        v_t.astype(mm), a.astype(mm), (((1,), (1,)), ((), ())),
        preferred_element_type=f32)                             # (C, BN) f32

    # ---- Lane-dense (2C, BN) output: torch.cat([x, FeatureMap], dim=1) ----
    out_ref[:C, :] = x_red_t.astype(out_ref.dtype)
    out_ref[C:, :] = fm_t.astype(out_ref.dtype)


# ---------------------------------------------------------------------------
# Wrapper: layout plumbing + pallas_call
# ---------------------------------------------------------------------------
def attention_module(x_en, x_de, x_cat, params, matmul_dtype=jnp.bfloat16):
    """AttentionModule forward.

    matmul_dtype: dtype of MXU operands / activation DMAs.  bf16 is
    recommended on all generations (v5e's MXU is natively bf16); accumulation
    and all elementwise math stay f32.  Use float32 for bit-faithful
    reference semantics.
    """
    B, C, H, W = x_en.shape
    N = H * W
    BN = B * N
    C4 = C // 4
    w_kq, b_kq, w_v, b_v, w_rc, b_rc = params   # conv layout (C_out, C_in), (C_out,)

    # ---- layout plumbing (XLA ops, outside the kernel) --------------------
    # TODO(synk): these NCHW <-> channel-first relayouts are pure HBM traffic;
    # if the surrounding UNet can produce/consume channel-first activations,
    # drop them and feed (C, B*N) slabs straight through.
    def rows(x):        # (B, Cx, H, W) -> (B*N, Cx): batch-major rows
        return jnp.transpose(x, (0, 2, 3, 1)).reshape(BN, x.shape[1])

    def chan_first(x):  # (B, Cx, H, W) -> (Cx, B*N): lane-dense columns
        return jnp.transpose(x.reshape(B, x.shape[1], N),
                             (1, 0, 2)).reshape(x.shape[1], BN)

    x_kq = jnp.concatenate([rows(x_en), rows(x_de)],
                           axis=0).astype(matmul_dtype)          # (2BN, C)
    x_cat_t = chan_first(x_cat).astype(matmul_dtype)             # (2C, BN)

    # Weight layouts as consumed by the kernel; biases stay f32 (post-accum).
    w_kq_k = jnp.transpose(w_kq).astype(matmul_dtype)            # (C, C4)
    w_v_k = w_v.astype(matmul_dtype)                             # (C, C)
    w_rc_k = w_rc.astype(matmul_dtype)                           # (C, 2C)
    b_kq_k = b_kq.reshape(1, C4).astype(jnp.float32)
    b_v_k = b_v.reshape(C, 1).astype(jnp.float32)
    b_rc_k = b_rc.reshape(C, 1).astype(jnp.float32)

    kernel = functools.partial(_attention_kernel, batch=B, seq=N)

    def full2(shape):
        return pl.BlockSpec(shape, lambda i: (0, 0))

    # One grid step for the whole batch: weights land in VMEM once and the
    # block-diagonal score path keeps every vreg 128 lanes wide.
    out_cf = pl.pallas_call(
        kernel,
        out_shape=jax.ShapeDtypeStruct((2 * C, BN), jnp.float32),
        grid_spec=pltpu.PrefetchScalarGridSpec(
            num_scalar_prefetch=0,
            grid=(1,),
            in_specs=[
                full2((2 * BN, C)),     # x_kq  (stacked x_en | x_de rows)
                full2((2 * C, BN)),     # x_cat, channel-first
                full2((C, C4)),         # w_kq
                full2((1, C4)),         # b_kq
                full2((C, C)),          # w_v
                full2((C, 1)),          # b_v
                full2((C, 2 * C)),      # w_rc
                full2((C, 1)),          # b_rc
            ],
            out_specs=full2((2 * C, BN)),
        ),
        compiler_params=pltpu.CompilerParams(
            dimension_semantics=("arbitrary",),
            vmem_limit_bytes=_vmem_limit_bytes(),
        ),
    )(x_kq, x_cat_t, w_kq_k, b_kq_k, w_v_k, b_v_k, w_rc_k, b_rc_k)

    # (2C, B*N) -> (B, 2C, H, W)
    return jnp.transpose(out_cf.reshape(2 * C, B, N),
                         (1, 0, 2)).reshape(B, 2 * C, H, W)


# ---------------------------------------------------------------------------
# Deterministic parameters: conv weights + eval-mode BN, folded (conv layout).
# ---------------------------------------------------------------------------
def make_params(key, C):
    C4 = C // 4
    eps = 1e-5
    ks = jax.random.split(key, 9)

    def fold(w_conv, gamma, beta, mean, var):
        # relu(BN(conv1x1(x)))  ->  relu(W_eff @ x_pix + b_eff)
        scale = gamma / jnp.sqrt(var + eps)
        w_eff = w_conv * scale[:, None]               # (C_out, C_in)
        b_eff = beta - mean * scale                   # (C_out,)
        return w_eff.astype(jnp.float32), b_eff.astype(jnp.float32)

    # Get_KQ: Conv2d(C -> C//4), BN(C//4)
    w_kq, b_kq = fold(0.2 * jax.random.normal(ks[0], (C4, C), jnp.float32),
                      1.0 + 0.1 * jax.random.normal(ks[1], (C4,), jnp.float32),
                      0.1 * jax.random.normal(ks[2], (C4,), jnp.float32),
                      jnp.zeros((C4,), jnp.float32), jnp.ones((C4,), jnp.float32))
    # Get_V: Conv2d(C -> C), BN(C)
    w_v, b_v = fold(0.2 * jax.random.normal(ks[3], (C, C), jnp.float32),
                    1.0 + 0.1 * jax.random.normal(ks[4], (C,), jnp.float32),
                    0.1 * jax.random.normal(ks[5], (C,), jnp.float32),
                    jnp.zeros((C,), jnp.float32), jnp.ones((C,), jnp.float32))
    # reduce_channels: Conv2d(2C -> C), BN(C)
    w_rc, b_rc = fold(0.2 * jax.random.normal(ks[6], (C, 2 * C), jnp.float32),
                      1.0 + 0.1 * jax.random.normal(ks[7], (C,), jnp.float32),
                      0.1 * jax.random.normal(ks[8], (C,), jnp.float32),
                      jnp.zeros((C,), jnp.float32), jnp.ones((C,), jnp.float32))
    return w_kq, b_kq, w_v, b_v, w_rc, b_rc


# ---------------------------------------------------------------------------
# Pure-JAX reference (same eval-mode BN folding).  matmul_dtype mirrors the
# kernel's mixed-precision casts so each path is checked like-for-like.
# ---------------------------------------------------------------------------
def reference(x_en, x_de, x_cat, params, matmul_dtype=jnp.float32):
    w_kq, b_kq, w_v, b_v, w_rc, b_rc = params
    B, C, H, W = x_en.shape
    N = H * W
    dt = matmul_dtype

    def to_nc(x):
        return jnp.transpose(x, (0, 2, 3, 1)).reshape(B, N, -1)

    def cbr(x_nc, w, b):   # w: (C_out, C_in) conv layout, b: (C_out,)
        y = jnp.einsum('bnc,dc->bnd', x_nc.astype(dt), w.astype(dt),
                       preferred_element_type=jnp.float32) + b
        return jnp.maximum(y, 0.0)

    K = cbr(to_nc(x_en), w_kq, b_kq)            # (B, N, C//4)
    Q = cbr(to_nc(x_de), w_kq, b_kq)            # (B, N, C//4)
    KQ = jnp.einsum('bic,bjc->bij', K.astype(dt), Q.astype(dt),
                    preferred_element_type=jnp.float32)           # (B, N, N)
    A = jax.nn.softmax(KQ.reshape(B, N * N), axis=1).reshape(B, N, N)
    x_red = cbr(to_nc(x_cat), w_rc, b_rc)       # (B, N, C)
    V = cbr(x_red, w_v, b_v)                    # (B, N, C)
    FM = jnp.einsum('bij,bjc->bic', A.astype(dt), V.astype(dt),
                    preferred_element_type=jnp.float32)           # (B, N, C)
    out_nc = jnp.concatenate([x_red, FM], axis=-1)
    return jnp.transpose(out_nc, (0, 2, 1)).reshape(B, 2 * C, H, W)


if __name__ == "__main__":
    B, C, H, W = 2, 16, 8, 8     # in_channels=16, N = 64, B*N = 128 lanes
    key = jax.random.PRNGKey(0)
    k1, k2, k3, kp = jax.random.split(key, 4)
    x_en = jax.random.normal(k1, (B, C, H, W), jnp.float32)
    x_de = jax.random.normal(k2, (B, C, H, W), jnp.float32)
    x_cat = jax.random.normal(k3, (B, 2 * C, H, W), jnp.float32)
    params = make_params(kp, C)

    # 1) Exact-semantics path: f32 MXU operands vs f32 reference (tight tol).
    out_f32 = attention_module(x_en, x_de, x_cat, params,
                               matmul_dtype=jnp.float32)
    jax.block_until_ready(out_f32)
    ref_f32 = reference(x_en, x_de, x_cat, params, matmul_dtype=jnp.float32)
    np.testing.assert_allclose(np.asarray(out_f32), np.asarray(ref_f32),
                               rtol=1e-4, atol=1e-4)

    # 2) Fast path (recommended on all generations): bf16 MXU operands with
    #    f32 accumulation / f32 elementwise, vs a matching mixed-precision ref.
    out_bf16 = attention_module(x_en, x_de, x_cat, params,
                                matmul_dtype=jnp.bfloat16)
    jax.block_until_ready(out_bf16)
    ref_bf16 = reference(x_en, x_de, x_cat, params, matmul_dtype=jnp.bfloat16)
    np.testing.assert_allclose(np.asarray(out_bf16), np.asarray(ref_bf16),
                               rtol=2e-2, atol=2e-2)

    print("KERNEL_OK")
</pallas_src>

<mosaic_0001>
module attributes {stable_mosaic.version = 11 : i64} {
  func.func @_attention_kernel(%arg0: i32, %arg1: memref<256x16xf32, #tpu.memory_space<vmem>>, %arg2: memref<32x128xf32, #tpu.memory_space<vmem>>, %arg3: memref<16x4xf32, #tpu.memory_space<vmem>>, %arg4: memref<1x4xf32, #tpu.memory_space<vmem>>, %arg5: memref<16x16xf32, #tpu.memory_space<vmem>>, %arg6: memref<16x1xf32, #tpu.memory_space<vmem>>, %arg7: memref<16x32xf32, #tpu.memory_space<vmem>>, %arg8: memref<16x1xf32, #tpu.memory_space<vmem>>, %arg9: memref<32x128xf32, #tpu.memory_space<vmem>>) attributes {dimension_semantics = [#tpu.dimension_semantics<arbitrary>], iteration_bounds = array<i64: 1>, scalar_prefetch = 0 : i64, scratch_operands = 0 : i64, tpu.core_type = #tpu.core_type<tc>, window_params = [{pipeline_mode = #tpu.pipeline_mode<synchronous>, transform_indices = @transform_0, window_bounds = array<i64: 256, 16>}, {pipeline_mode = #tpu.pipeline_mode<synchronous>, transform_indices = @transform_1, window_bounds = array<i64: 32, 128>}, {pipeline_mode = #tpu.pipeline_mode<synchronous>, transform_indices = @transform_2, window_bounds = array<i64: 16, 4>}, {pipeline_mode = #tpu.pipeline_mode<synchronous>, transform_indices = @transform_3, window_bounds = array<i64: 1, 4>}, {pipeline_mode = #tpu.pipeline_mode<synchronous>, transform_indices = @transform_4, window_bounds = array<i64: 16, 16>}, {pipeline_mode = #tpu.pipeline_mode<synchronous>, transform_indices = @transform_5, window_bounds = array<i64: 16, 1>}, {pipeline_mode = #tpu.pipeline_mode<synchronous>, transform_indices = @transform_6, window_bounds = array<i64: 16, 32>}, {pipeline_mode = #tpu.pipeline_mode<synchronous>, transform_indices = @transform_7, window_bounds = array<i64: 16, 1>}, {pipeline_mode = #tpu.pipeline_mode<synchronous>, transform_indices = @transform_8, window_bounds = array<i64: 32, 128>}]} {
    %c0 = arith.constant 0 : index
    %c0_0 = arith.constant 0 : index
    %0 = vector.load %arg1[%c0, %c0_0] : memref<256x16xf32, #tpu.memory_space<vmem>>, vector<256x16xf32>
    %c0_1 = arith.constant 0 : index
    %c0_2 = arith.constant 0 : index
    %1 = vector.load %arg3[%c0_1, %c0_2] : memref<16x4xf32, #tpu.memory_space<vmem>>, vector<16x4xf32>
    %cst = arith.constant dense<0.000000e+00> : vector<256x4xf32>
    %2 = tpu.matmul %0, %1, %cst {dimension_numbers = #tpu.dot_dimension_numbers<[1], [0], [0], [1], [0, 0, 1, 1], [], []>} : vector<256x16xf32>, vector<16x4xf32>, vector<256x4xf32> -> vector<256x4xf32>
    %c0_3 = arith.constant 0 : index
    %c0_4 = arith.constant 0 : index
    %3 = vector.load %arg4[%c0_3, %c0_4] : memref<1x4xf32, #tpu.memory_space<vmem>>, vector<1x4xf32>
    %4 = vector.broadcast %3 : vector<1x4xf32> to vector<256x4xf32>
    %5 = arith.addf %2, %4 : vector<256x4xf32>
    %cst_5 = arith.constant 0.000000e+00 : f32
    %6 = vector.broadcast %cst_5 : f32 to vector<256x4xf32>
    %7 = arith.maximumf %5, %6 : vector<256x4xf32>
    %8 = vector.extract_strided_slice %7 {offsets = [0, 0], sizes = [128, 4], strides = [1, 1]} : vector<256x4xf32> to vector<128x4xf32>
    %9 = vector.extract_strided_slice %7 {offsets = [128, 0], sizes = [128, 4], strides = [1, 1]} : vector<256x4xf32> to vector<128x4xf32>
    %c0_6 = arith.constant 0 : index
    %c0_7 = arith.constant 0 : index
    %10 = vector.load %arg7[%c0_6, %c0_7] : memref<16x32xf32, #tpu.memory_space<vmem>>, vector<16x32xf32>
    %c0_8 = arith.constant 0 : index
    %c0_9 = arith.constant 0 : index
    %11 = vector.load %arg2[%c0_8, %c0_9] : memref<32x128xf32, #tpu.memory_space<vmem>>, vector<32x128xf32>
    %cst_10 = arith.constant dense<0.000000e+00> : vector<16x128xf32>
    %12 = tpu.matmul %10, %11, %cst_10 {dimension_numbers = #tpu.dot_dimension_numbers<[1], [0], [0], [1], [0, 0, 1, 1], [], []>} : vector<16x32xf32>, vector<32x128xf32>, vector<16x128xf32> -> vector<16x128xf32>
    %c0_11 = arith.constant 0 : index
    %c0_12 = arith.constant 0 : index
    %13 = vector.load %arg8[%c0_11, %c0_12] : memref<16x1xf32, #tpu.memory_space<vmem>>, vector<16x1xf32>
    %14 = vector.broadcast %13 : vector<16x1xf32> to vector<16x128xf32>
    %15 = arith.addf %12, %14 : vector<16x128xf32>
    %cst_13 = arith.constant 0.000000e+00 : f32
    %16 = vector.broadcast %cst_13 : f32 to vector<16x128xf32>
    %17 = arith.maximumf %15, %16 : vector<16x128xf32>
    %c0_14 = arith.constant 0 : index
    %c0_15 = arith.constant 0 : index
    %18 = vector.load %arg5[%c0_14, %c0_15] : memref<16x16xf32, #tpu.memory_space<vmem>>, vector<16x16xf32>
    %cst_16 = arith.constant dense<0.000000e+00> : vector<16x128xf32>
    %19 = tpu.matmul %18, %17, %cst_16 {dimension_numbers = #tpu.dot_dimension_numbers<[1], [0], [0], [1], [0, 0, 1, 1], [], []>} : vector<16x16xf32>, vector<16x128xf32>, vector<16x128xf32> -> vector<16x128xf32>
    %c0_17 = arith.constant 0 : index
    %c0_18 = arith.constant 0 : index
    %20 = vector.load %arg6[%c0_17, %c0_18] : memref<16x1xf32, #tpu.memory_space<vmem>>, vector<16x1xf32>
    %21 = vector.broadcast %20 : vector<16x1xf32> to vector<16x128xf32>
    %22 = arith.addf %19, %21 : vector<16x128xf32>
    %cst_19 = arith.constant 0.000000e+00 : f32
    %23 = vector.broadcast %cst_19 : f32 to vector<16x128xf32>
    %24 = arith.maximumf %22, %23 : vector<16x128xf32>
    %cst_20 = arith.constant dense<0.000000e+00> : vector<128x128xf32>
    %25 = tpu.matmul %8, %9, %cst_20 {dimension_numbers = #tpu.dot_dimension_numbers<[1], [1], [0], [0], [0, 0, 1, 0], [], []>} : vector<128x4xf32>, vector<128x4xf32>, vector<128x128xf32> -> vector<128x128xf32>
    %26 = vector.shape_cast %25 : vector<128x128xf32> to vector<2x64x128xf32>
    %27 = tpu.iota {dimensions = array<i32: 2>} : vector<1x64x128xi32>
    %28 = tpu.iota {dimensions = array<i32: 0>} : vector<2x1x1xi32>
    %c64_i32 = arith.constant 64 : i32
    %29 = vector.broadcast %c64_i32 : i32 to vector<2x1x1xi32>
    %30 = arith.muli %28, %29 : vector<2x1x1xi32>
    %31 = vector.broadcast %27 : vector<1x64x128xi32> to vector<2x64x128xi32>
    %32 = vector.broadcast %30 : vector<2x1x1xi32> to vector<2x64x128xi32>
    %33 = arith.cmpi sge, %31, %32 : vector<2x64x128xi32>
    %c64_i32_21 = arith.constant 64 : i32
    %34 = vector.broadcast %c64_i32_21 : i32 to vector<2x1x1xi32>
    %35 = arith.addi %30, %34 : vector<2x1x1xi32>
    %36 = vector.broadcast %27 : vector<1x64x128xi32> to vector<2x64x128xi32>
    %37 = vector.broadcast %35 : vector<2x1x1xi32> to vector<2x64x128xi32>
    %38 = arith.cmpi slt, %36, %37 : vector<2x64x128xi32>
    %39 = arith.andi %33, %38 : vector<2x64x128xi1>
    %cst_22 = arith.constant -1.000000e+30 : f32
    %40 = vector.broadcast %cst_22 : f32 to vector<2x64x128xf32>
    %41 = arith.select %39, %26, %40 : vector<2x64x128xi1>, vector<2x64x128xf32>
    %cst_23 = arith.constant dense<0xFF800000> : vector<2x64xf32>
    %42 = vector.multi_reduction <maximumf>, %41, %cst_23 [2] : vector<2x64x128xf32> to vector<2x64xf32>
    %43 = vector.shape_cast %42 : vector<2x64xf32> to vector<2x64x1xf32>
    %cst_24 = arith.constant dense<0xFF800000> : vector<2x1xf32>
    %44 = vector.multi_reduction <maximumf>, %43, %cst_24 [1] : vector<2x64x1xf32> to vector<2x1xf32>
    %45 = vector.shape_cast %44 : vector<2x1xf32> to vector<2x1x1xf32>
    %46 = vector.broadcast %45 : vector<2x1x1xf32> to vector<2x64x128xf32>
    %47 = arith.subf %41, %46 : vector<2x64x128xf32>
    %48 = math.exp %47 : vector<2x64x128xf32>
    %cst_25 = arith.constant dense<0.000000e+00> : vector<2x64xf32>
    %49 = vector.multi_reduction <add>, %48, %cst_25 [2] : vector<2x64x128xf32> to vector<2x64xf32>
    %50 = vector.shape_cast %49 : vector<2x64xf32> to vector<2x64x1xf32>
    %cst_26 = arith.constant dense<0.000000e+00> : vector<2x1xf32>
    %51 = vector.multi_reduction <add>, %50, %cst_26 [1] : vector<2x64x1xf32> to vector<2x1xf32>
    %52 = vector.shape_cast %51 : vector<2x1xf32> to vector<2x1x1xf32>
    %cst_27 = arith.constant 1.000000e+00 : f32
    %53 = vector.broadcast %cst_27 : f32 to vector<2x1x1xf32>
    %54 = arith.divf %53, %52 : vector<2x1x1xf32>
    %55 = vector.broadcast %54 : vector<2x1x1xf32> to vector<2x64x128xf32>
    %56 = arith.mulf %48, %55 : vector<2x64x128xf32>
    %57 = vector.shape_cast %56 : vector<2x64x128xf32> to vector<128x128xf32>
    %cst_28 = arith.constant dense<0.000000e+00> : vector<16x128xf32>
    %58 = tpu.matmul %24, %57, %cst_28 {dimension_numbers = #tpu.dot_dimension_numbers<[1], [1], [0], [0], [0, 0, 1, 0], [], []>} : vector<16x128xf32>, vector<128x128xf32>, vector<16x128xf32> -> vector<16x128xf32>
    %c0_29 = arith.constant 0 : index
    %c0_30 = arith.constant 0 : index
    %59 = vector.load %arg9[%c0_29, %c0_30] : memref<32x128xf32, #tpu.memory_space<vmem>>, vector<16x128xf32>
    tpu.vector_store %arg9[%c0_29, %c0_30], %17 {strides = array<i32>} : memref<32x128xf32, #tpu.memory_space<vmem>>, vector<16x128xf32>,
    %c16 = arith.constant 16 : index
    %c0_31 = arith.constant 0 : index
    %60 = vector.load %arg9[%c16, %c0_31] : memref<32x128xf32, #tpu.memory_space<vmem>>, vector<16x128xf32>
    tpu.vector_store %arg9[%c16, %c0_31], %58 {strides = array<i32>} : memref<32x128xf32, #tpu.memory_space<vmem>>, vector<16x128xf32>,
    return
  }
  func.func @transform_0(%arg0: i32) -> (i32, i32) {
    %c0_i32 = arith.constant 0 : i32
    %c0_i32_0 = arith.constant 0 : i32
    %c0_i32_1 = arith.constant 0 : i32
    return %c0_i32, %c0_i32_0 : i32, i32
  }
  func.func @transform_1(%arg0: i32) -> (i32, i32) {
    %c0_i32 = arith.constant 0 : i32
    %c0_i32_0 = arith.constant 0 : i32
    %c0_i32_1 = arith.constant 0 : i32
    return %c0_i32, %c0_i32_0 : i32, i32
  }
  func.func @transform_2(%arg0: i32) -> (i32, i32) {
    %c0_i32 = arith.constant 0 : i32
    %c0_i32_0 = arith.constant 0 : i32
    %c0_i32_1 = arith.constant 0 : i32
    return %c0_i32, %c0_i32_0 : i32, i32
  }
  func.func @transform_3(%arg0: i32) -> (i32, i32) {
    %c0_i32 = arith.constant 0 : i32
    %c0_i32_0 = arith.constant 0 : i32
    %c0_i32_1 = arith.constant 0 : i32
    return %c0_i32, %c0_i32_0 : i32, i32
  }
  func.func @transform_4(%arg0: i32) -> (i32, i32) {
    %c0_i32 = arith.constant 0 : i32
    %c0_i32_0 = arith.constant 0 : i32
    %c0_i32_1 = arith.constant 0 : i32
    return %c0_i32, %c0_i32_0 : i32, i32
  }
  func.func @transform_5(%arg0: i32) -> (i32, i32) {
    %c0_i32 = arith.constant 0 : i32
    %c0_i32_0 = arith.constant 0 : i32
    %c0_i32_1 = arith.constant 0 : i32
    return %c0_i32, %c0_i32_0 : i32, i32
  }
  func.func @transform_6(%arg0: i32) -> (i32, i32) {
    %c0_i32 = arith.constant 0 : i32
    %c0_i32_0 = arith.constant 0 : i32
    %c0_i32_1 = arith.constant 0 : i32
    return %c0_i32, %c0_i32_0 : i32, i32
  }
  func.func @transform_7(%arg0: i32) -> (i32, i32) {
    %c0_i32 = arith.constant 0 : i32
    %c0_i32_0 = arith.constant 0 : i32
    %c0_i32_1 = arith.constant 0 : i32
    return %c0_i32, %c0_i32_0 : i32, i32
  }
  func.func @transform_8(%arg0: i32) -> (i32, i32) {
    %c0_i32 = arith.constant 0 : i32
    %c0_i32_0 = arith.constant 0 : i32
    %c0_i32_1 = arith.constant 0 : i32
    return %c0_i32, %c0_i32_0 : i32, i32
  }
}

</mosaic_0001>

<llo_original>
// kernel: tpu_custom_call.1
$region0: #{tpu_custom_call.1}
  #allocation0 [shape = 'u32[]', space=smem, size = 0x4, offset = 0x4, fixed_abs, tag = 'smem constant byte address 0x4 - core index']
  #allocation1 [shape = 'u32[72,128]{1,0:T(1,128)}', space=vmem, size = 0x9000, scoped, tag = 'internal scratch']
  %s0 = inlined_call_operand.vmem [shape: f32[256,16], index: 0, kind: input, shape index: {}]
  %s1 = inlined_call_operand.vmem [shape: f32[32,128], index: 1, kind: input, shape index: {}]
  %s2 = inlined_call_operand.vmem [shape: f32[16,4], index: 2, kind: input, shape index: {}]
  %s3 = inlined_call_operand.vmem [shape: f32[1,4], index: 3, kind: input, shape index: {}]
  %s4 = inlined_call_operand.vmem [shape: f32[16,16], index: 4, kind: input, shape index: {}]
  %s5 = inlined_call_operand.vmem [shape: f32[16,1], index: 5, kind: input, shape index: {}]
  %s6 = inlined_call_operand.vmem [shape: f32[16,32], index: 6, kind: input, shape index: {}]
  %s7 = inlined_call_operand.vmem [shape: f32[16,1], index: 7, kind: input, shape index: {}]
  %s8 = inlined_call_operand.hbm [shape: f32[32,128], index: 8, kind: output, shape index: {}]
  %s9 = sld [smem:[#allocation0]]
  $region42: #{tpu_custom_call.1} parent=0
    _
  %s11 = ssub.s32 1, %s9
  %s12 = scalar_select 0, %s11, %s9
  $region1: #{tpu_custom_call.1} parent=0
    #allocation2 [shape = 'u8[16384]{0}', space=vmem, size = 0x4000, scoped, tag = 'output window, operand 0, single buffered']
    #allocation3 [shape = 's32[1]{0}', space=sflag, size = 0x4, scoped, tag = 'scoped memory for tpu_custom_call.1']
    %13 = vsyncpa [#allocation3], 0
    // Predicated region
    $region2: #{tpu_custom_call.1} parent=1 // pred_check
      _
    $region3: #{tpu_custom_call.1} parent=1 // pred_check_branch
      %15 = sbr.rel (0) target = $region5
    $region4: #{tpu_custom_call.1} parent=1 // pred_region
      _
    $region5: #{tpu_custom_call.1} parent=1 // pred_fallthru
      _
    // Predicated region
    $region6: #{tpu_custom_call.1} parent=1 // pred_check
      _
    $region7: #{tpu_custom_call.1} parent=1 // pred_check_branch
      %17 = sbr.rel (0) target = $region9
    $region8: #{tpu_custom_call.1} parent=1 // pred_region
      _
    $region9: #{tpu_custom_call.1} parent=1 // pred_fallthru
      _
    // Predicated region
    $region10: #{tpu_custom_call.1} parent=1 // pred_check
      _
    $region11: #{tpu_custom_call.1} parent=1 // pred_check_branch
      %19 = sbr.rel (0) target = $region13
    $region12: #{tpu_custom_call.1} parent=1 // pred_region
      _
    $region13: #{tpu_custom_call.1} parent=1 // pred_fallthru
      _
    // Predicated region
    $region14: #{tpu_custom_call.1} parent=1 // pred_check
      _
    $region15: #{tpu_custom_call.1} parent=1 // pred_check_branch
      %21 = sbr.rel (0) target = $region17
    $region16: #{tpu_custom_call.1} parent=1 // pred_region
      _
    $region17: #{tpu_custom_call.1} parent=1 // pred_fallthru
      _
    // Predicated region
    $region18: #{tpu_custom_call.1} parent=1 // pred_check
      _
    $region19: #{tpu_custom_call.1} parent=1 // pred_check_branch
      %23 = sbr.rel (0) target = $region21
    $region20: #{tpu_custom_call.1} parent=1 // pred_region
      _
    $region21: #{tpu_custom_call.1} parent=1 // pred_fallthru
      _
    // Predicated region
    $region22: #{tpu_custom_call.1} parent=1 // pred_check
      _
    $region23: #{tpu_custom_call.1} parent=1 // pred_check_branch
      %25 = sbr.rel (0) target = $region25
    $region24: #{tpu_custom_call.1} parent=1 // pred_region
      _
    $region25: #{tpu_custom_call.1} parent=1 // pred_fallthru
      _
    // Predicated region
    $region26: #{tpu_custom_call.1} parent=1 // pred_check
      _
    $region27: #{tpu_custom_call.1} parent=1 // pred_check_branch
      %27 = sbr.rel (0) target = $region29
    $region28: #{tpu_custom_call.1} parent=1 // pred_region
      _
    $region29: #{tpu_custom_call.1} parent=1 // pred_fallthru
      _
    // Predicated region
    $region30: #{tpu_custom_call.1} parent=1 // pred_check
      _
    $region31: #{tpu_custom_call.1} parent=1 // pred_check_branch
      %29 = sbr.rel (0) target = $region33
    $region32: #{tpu_custom_call.1} parent=1 // pred_region
      _
    $region33: #{tpu_custom_call.1} parent=1 // pred_fallthru
      _
    %v30 = vld [vmem:[%s0] sm:$0xff]
    %v31 = vld [vmem:[%s0 + $0x8] sm:$0xff]
    %v32 = vld [vmem:[%s0 + $0x10] sm:$0xff]
    %v33 = vld [vmem:[%s0 + $0x18] sm:$0xff]
    %v34 = vld [vmem:[%s0 + $0x20] sm:$0xff]
    %v35 = vld [vmem:[%s0 + $0x28] sm:$0xff]
    %v36 = vld [vmem:[%s0 + $0x30] sm:$0xff]
    %v37 = vld [vmem:[%s0 + $0x38] sm:$0xff]
    %v38 = vld [vmem:[%s0 + $0x40] sm:$0xff]
    %v39 = vld [vmem:[%s0 + $0x48] sm:$0xff]
    %v40 = vld [vmem:[%s0 + $0x50] sm:$0xff]
    %v41 = vld [vmem:[%s0 + $0x58] sm:$0xff]
    %v42 = vld [vmem:[%s0 + $0x60] sm:$0xff]
    %v43 = vld [vmem:[%s0 + $0x68] sm:$0xff]
    %v44 = vld [vmem:[%s0 + $0x70] sm:$0xff]
    %v45 = vld [vmem:[%s0 + $0x78] sm:$0xff]
    %v46 = vld [vmem:[%s0 + $0x80] sm:$0xff]
    %v47 = vld [vmem:[%s0 + $0x88] sm:$0xff]
    %v48 = vld [vmem:[%s0 + $0x90] sm:$0xff]
    %v49 = vld [vmem:[%s0 + $0x98] sm:$0xff]
    %v50 = vld [vmem:[%s0 + $0xa0] sm:$0xff]
    %v51 = vld [vmem:[%s0 + $0xa8] sm:$0xff]
    %v52 = vld [vmem:[%s0 + $0xb0] sm:$0xff]
    %v53 = vld [vmem:[%s0 + $0xb8] sm:$0xff]
    %v54 = vld [vmem:[%s0 + $0xc0] sm:$0xff]
    %v55 = vld [vmem:[%s0 + $0xc8] sm:$0xff]
    %v56 = vld [vmem:[%s0 + $0xd0] sm:$0xff]
    %v57 = vld [vmem:[%s0 + $0xd8] sm:$0xff]
    %v58 = vld [vmem:[%s0 + $0xe0] sm:$0xff]
    %v59 = vld [vmem:[%s0 + $0xe8] sm:$0xff]
    %v60 = vld [vmem:[%s0 + $0xf0] sm:$0xff]
    %v61 = vld [vmem:[%s0 + $0xf8] sm:$0xff]
    %v62 = vld [vmem:[%s2] sm:$0xff]
    %v63 = vld [vmem:[%s2 + $0x8] sm:$0xff]
    %v64 = vld [vmem:[%s3] sm:$0x1]
    %v66 = vperm.slane %v64, 0
    %vm68 = vcmask 130048
    %v70 = vsel %vm68, %v30, 0
    %v73 = vsel %vm68, %v31, 0
    %v76 = vsel %vm68, %v32, 0
    %v79 = vsel %vm68, %v33, 0
    %v82 = vsel %vm68, %v34, 0
    %v85 = vsel %vm68, %v35, 0
    %v88 = vsel %vm68, %v36, 0
    %v91 = vsel %vm68, %v37, 0
    %v94 = vsel %vm68, %v38, 0
    %v97 = vsel %vm68, %v39, 0
    %v100 = vsel %vm68, %v40, 0
    %v103 = vsel %vm68, %v41, 0
    %v106 = vsel %vm68, %v42, 0
    %v109 = vsel %vm68, %v43, 0
    %v112 = vsel %vm68, %v44, 0
    %v115 = vsel %vm68, %v45, 0
    %v118 = vsel %vm68, %v46, 0
    %v121 = vsel %vm68, %v47, 0
    %v124 = vsel %vm68, %v48, 0
    %v127 = vsel %vm68, %v49, 0
    %v130 = vsel %vm68, %v50, 0
    %v133 = vsel %vm68, %v51, 0
    %v136 = vsel %vm68, %v52, 0
    %v139 = vsel %vm68, %v53, 0
    %v142 = vsel %vm68, %v54, 0
    %v145 = vsel %vm68, %v55, 0
    %v148 = vsel %vm68, %v56, 0
    %v151 = vsel %vm68, %v57, 0
    %v154 = vsel %vm68, %v58, 0
    %v157 = vsel %vm68, %v59, 0
    %v160 = vsel %vm68, %v60, 0
    %v163 = vsel %vm68, %v61, 0
    %165 = vmatpush.msra.mxu0 0.0
    %166 = vmatpush.msra.mxu0 0.0
    %167 = vmatpush.msra.mxu0 0.0
    %168 = vmatpush.msra.mxu0 0.0
    %169 = vmatpush.msra.mxu0 0.0
    %170 = vmatpush.msra.mxu0 0.0
    %171 = vmatpush.msra.mxu0 0.0
    %172 = vmatpush.msra.mxu0 0.0
    %173 = vmatpush.msra.mxu0 0.0
    %174 = vmatpush.msra.mxu0 0.0
    %175 = vmatpush.msra.mxu0 0.0
    %176 = vmatpush.msra.mxu0 0.0
    %177 = vmatpush.msra.mxu0 0.0
    %178 = vmatpush.msra.mxu0 0.0
    %179 = vmatpush.msra.mxu0 %v63
    %180 = vmatpush.msra.mxu0 %v62
    %181 = vmatmul.f32.gmra.mxu0 %v70
    %v182 = vpop.f32.mrf.mxu0
    %v183 = vadd.f32 %v66, %v182
    %184 = vmatmul.f32.gmra.mxu0 %v73
    %v185 = vpop.f32.mrf.mxu0
    %v186 = vadd.f32 %v66, %v185
    %187 = vmatmul.f32.gmra.mxu0 %v76
    %v188 = vpop.f32.mrf.mxu0
    %v189 = vadd.f32 %v66, %v188
    %190 = vmatmul.f32.gmra.mxu0 %v79
    %v191 = vpop.f32.mrf.mxu0
    %v192 = vadd.f32 %v66, %v191
    %193 = vmatmul.f32.gmra.mxu0 %v82
    %v194 = vpop.f32.mrf.mxu0
    %v195 = vadd.f32 %v66, %v194
    %196 = vmatmul.f32.gmra.mxu0 %v85
    %v197 = vpop.f32.mrf.mxu0
    %v198 = vadd.f32 %v66, %v197
    %199 = vmatmul.f32.gmra.mxu0 %v88
    %v200 = vpop.f32.mrf.mxu0
    %v201 = vadd.f32 %v66, %v200
    %202 = vmatmul.f32.gmra.mxu0 %v91
    %v203 = vpop.f32.mrf.mxu0
    %v204 = vadd.f32 %v66, %v203
    %205 = vmatmul.f32.gmra.mxu0 %v94
    %v206 = vpop.f32.mrf.mxu0
    %v207 = vadd.f32 %v66, %v206
    %208 = vmatmul.f32.gmra.mxu0 %v97
    %v209 = vpop.f32.mrf.mxu0
    %v210 = vadd.f32 %v66, %v209
    %211 = vmatmul.f32.gmra.mxu0 %v100
    %v212 = vpop.f32.mrf.mxu0
    %v213 = vadd.f32 %v66, %v212
    %214 = vmatmul.f32.gmra.mxu0 %v103
    %v215 = vpop.f32.mrf.mxu0
    %v216 = vadd.f32 %v66, %v215
    %217 = vmatmul.f32.gmra.mxu0 %v106
    %v218 = vpop.f32.mrf.mxu0
    %v219 = vadd.f32 %v66, %v218
    %220 = vmatmul.f32.gmra.mxu0 %v109
    %v221 = vpop.f32.mrf.mxu0
    %v222 = vadd.f32 %v66, %v221
    %223 = vmatmul.f32.gmra.mxu0 %v112
    %v224 = vpop.f32.mrf.mxu0
    %v225 = vadd.f32 %v66, %v224
    %226 = vmatmul.f32.gmra.mxu0 %v115
    %v227 = vpop.f32.mrf.mxu0
    %v228 = vadd.f32 %v66, %v227
    %229 = vmatmul.f32.gmra.mxu0 %v118
    %v230 = vpop.f32.mrf.mxu0
    %v231 = vadd.f32 %v66, %v230
    %232 = vmatmul.f32.gmra.mxu0 %v121
    %v233 = vpop.f32.mrf.mxu0
    %v234 = vadd.f32 %v66, %v233
    %235 = vmatmul.f32.gmra.mxu0 %v124
    %v236 = vpop.f32.mrf.mxu0
    %v237 = vadd.f32 %v66, %v236
    %238 = vmatmul.f32.gmra.mxu0 %v127
    %v239 = vpop.f32.mrf.mxu0
    %v240 = vadd.f32 %v66, %v239
    %241 = vmatmul.f32.gmra.mxu0 %v130
    %v242 = vpop.f32.mrf.mxu0
    %v243 = vadd.f32 %v66, %v242
    %244 = vmatmul.f32.gmra.mxu0 %v133
    %v245 = vpop.f32.mrf.mxu0
    %v246 = vadd.f32 %v66, %v245
    %247 = vmatmul.f32.gmra.mxu0 %v136
    %v248 = vpop.f32.mrf.mxu0
    %v249 = vadd.f32 %v66, %v248
    %250 = vmatmul.f32.gmra.mxu0 %v139
    %v251 = vpop.f32.mrf.mxu0
    %v252 = vadd.f32 %v66, %v251
    %253 = vmatmul.f32.gmra.mxu0 %v142
    %v254 = vpop.f32.mrf.mxu0
    %v255 = vadd.f32 %v66, %v254
    %256 = vmatmul.f32.gmra.mxu0 %v145
    %v257 = vpop.f32.mrf.mxu0
    %v258 = vadd.f32 %v66, %v257
    %259 = vmatmul.f32.gmra.mxu0 %v148
    %v260 = vpop.f32.mrf.mxu0
    %v261 = vadd.f32 %v66, %v260
    %262 = vmatmul.f32.gmra.mxu0 %v151
    %v263 = vpop.f32.mrf.mxu0
    %v264 = vadd.f32 %v66, %v263
    %265 = vmatmul.f32.gmra.mxu0 %v154
    %v266 = vpop.f32.mrf.mxu0
    %v267 = vadd.f32 %v66, %v266
    %268 = vmatmul.f32.gmra.mxu0 %v157
    %v269 = vpop.f32.mrf.mxu0
    %v270 = vadd.f32 %v66, %v269
    %271 = vmatmul.f32.gmra.mxu0 %v160
    %v272 = vpop.f32.mrf.mxu0
    %v273 = vadd.f32 %v66, %v272
    %274 = vmatmul.f32.gmra.mxu0 %v163
    %v275 = vpop.f32.mrf.mxu0
    %v276 = vadd.f32 %v66, %v275
    %277 = vdwg.mxu0
    %v278 = vmax.f32 %v183, 0.0
    %v279 = vmax.f32 %v186, 0.0
    %v280 = vmax.f32 %v189, 0.0
    %v281 = vmax.f32 %v192, 0.0
    %v282 = vmax.f32 %v195, 0.0
    %v283 = vmax.f32 %v198, 0.0
    %v284 = vmax.f32 %v201, 0.0
    %v285 = vmax.f32 %v204, 0.0
    %v286 = vmax.f32 %v207, 0.0
    %v287 = vmax.f32 %v210, 0.0
    %v288 = vmax.f32 %v213, 0.0
    %v289 = vmax.f32 %v216, 0.0
    %v290 = vmax.f32 %v219, 0.0
    %v291 = vmax.f32 %v222, 0.0
    %v292 = vmax.f32 %v225, 0.0
    %v293 = vmax.f32 %v228, 0.0
    %v294 = vmax.f32 %v231, 0.0
    %v295 = vmax.f32 %v234, 0.0
    %v296 = vmax.f32 %v237, 0.0
    %v297 = vmax.f32 %v240, 0.0
    %v298 = vmax.f32 %v243, 0.0
    %v299 = vmax.f32 %v246, 0.0
    %v300 = vmax.f32 %v249, 0.0
    %v301 = vmax.f32 %v252, 0.0
    %v302 = vmax.f32 %v255, 0.0
    %v303 = vmax.f32 %v258, 0.0
    %v304 = vmax.f32 %v261, 0.0
    %v305 = vmax.f32 %v264, 0.0
    %v306 = vmax.f32 %v267, 0.0
    %v307 = vmax.f32 %v270, 0.0
    %v308 = vmax.f32 %v273, 0.0
    %v309 = vmax.f32 %v276, 0.0
    %v310 = vld [vmem:[%s6] sm:$0xff]
    %v311 = vld [vmem:[%s6 + $0x8] sm:$0xff]
    %v312 = vld [vmem:[%s1] sm:$0xff]
    %v313 = vld [vmem:[%s1 + $0x8] sm:$0xff]
    %v314 = vld [vmem:[%s1 + $0x10] sm:$0xff]
    %v315 = vld [vmem:[%s1 + $0x18] sm:$0xff]
    %v316 = vld [vmem:[%s7] sm:$0xff]
    %v317 = vld [vmem:[%s7 + $0x8] sm:$0xff]
    %319 = vset.pattern.permute.xlu0 0
    %320 = vperm.xlu0 %319, %v316
    %v321 = vpop.permute.xlu0 %320
    %324 = vset.pattern.permute.xlu0 0
    %325 = vperm.xlu0 %324, %v317
    %v326 = vpop.permute.xlu0 %325
    %vm328 = vcmask 261120
    %v330 = vsel %vm328, %v310, 0
    %v333 = vsel %vm328, %v311, 0
    %335 = vmatpush.msra.mxu0 0.0
    %336 = vmatpush.msra.mxu0 0.0
    %337 = vmatpush.msra.mxu0 0.0
    %338 = vmatpush.msra.mxu0 0.0
    %339 = vmatpush.msra.mxu0 0.0
    %340 = vmatpush.msra.mxu0 0.0
    %341 = vmatpush.msra.mxu0 0.0
    %342 = vmatpush.msra.mxu0 0.0
    %343 = vmatpush.msra.mxu0 0.0
    %344 = vmatpush.msra.mxu0 0.0
    %345 = vmatpush.msra.mxu0 0.0
    %346 = vmatpush.msra.mxu0 0.0
    %347 = vmatpush.msra.mxu0 %v315
    %348 = vmatpush.msra.mxu0 %v314
    %349 = vmatpush.msra.mxu0 %v313
    %350 = vmatpush.msra.mxu0 %v312
    %351 = vmatmul.f32.gmra.mxu0 %v330
    %v352 = vpop.f32.mrf.mxu0
    %v353 = vadd.f32 %v321, %v352
    %354 = vmatmul.f32.gmra.mxu0 %v333
    %v355 = vpop.f32.mrf.mxu0
    %v356 = vadd.f32 %v326, %v355
    %357 = vdwg.mxu0
    %v358 = vmax.f32 %v353, 0.0
    %v359 = vmax.f32 %v356, 0.0
    %v360 = vld [vmem:[%s4] sm:$0xff]
    %v361 = vld [vmem:[%s4 + $0x8] sm:$0xff]
    %v362 = vld [vmem:[%s5] sm:$0xff]
    %v363 = vld [vmem:[%s5 + $0x8] sm:$0xff]
    %365 = vset.pattern.permute.xlu0 0
    %366 = vperm.xlu0 %365, %v362
    %v367 = vpop.permute.xlu0 %366
    %370 = vset.pattern.permute.xlu0 0
    %371 = vperm.xlu0 %370, %v363
    %v372 = vpop.permute.xlu0 %371
    %v375 = vsel %vm68, %v360, 0
    %v378 = vsel %vm68, %v361, 0
    %380 = vmatpush.msra.mxu0 0.0
    %381 = vmatpush.msra.mxu0 0.0
    %382 = vmatpush.msra.mxu0 0.0
    %383 = vmatpush.msra.mxu0 0.0
    %384 = vmatpush.msra.mxu0 0.0
    %385 = vmatpush.msra.mxu0 0.0
    %386 = vmatpush.msra.mxu0 0.0
    %387 = vmatpush.msra.mxu0 0.0
    %388 = vmatpush.msra.mxu0 0.0
    %389 = vmatpush.msra.mxu0 0.0
    %390 = vmatpush.msra.mxu0 0.0
    %391 = vmatpush.msra.mxu0 0.0
    %392 = vmatpush.msra.mxu0 0.0
    %393 = vmatpush.msra.mxu0 0.0
    %394 = vmatpush.msra.mxu0 %v359
    %395 = vmatpush.msra.mxu0 %v358
    %396 = vmatmul.f32.gmra.mxu0 %v375
    %v397 = vpop.f32.mrf.mxu0
    %v398 = vadd.f32 %v367, %v397
    %399 = vmatmul.f32.gmra.mxu0 %v378
    %v400 = vpop.f32.mrf.mxu0
    %v401 = vadd.f32 %v372, %v400
    %402 = vdwg.mxu0
    %v403 = vmax.f32 %v398, 0.0
    %v404 = vmax.f32 %v401, 0.0
    %vm405 = vcmask 31744
    %v407 = vsel %vm405, %v278, 0
    %v410 = vsel %vm405, %v279, 0
    %v413 = vsel %vm405, %v280, 0
    %v416 = vsel %vm405, %v281, 0
    %v419 = vsel %vm405, %v282, 0
    %v422 = vsel %vm405, %v283, 0
    %v425 = vsel %vm405, %v284, 0
    %v428 = vsel %vm405, %v285, 0
    %v431 = vsel %vm405, %v286, 0
    %v434 = vsel %vm405, %v287, 0
    %v437 = vsel %vm405, %v288, 0
    %v440 = vsel %vm405, %v289, 0
    %v443 = vsel %vm405, %v290, 0
    %v446 = vsel %vm405, %v291, 0
    %v449 = vsel %vm405, %v292, 0
    %v452 = vsel %vm405, %v293, 0
    %v455 = vsel %vm405, %v294, 0
    %v458 = vsel %vm405, %v295, 0
    %v461 = vsel %vm405, %v296, 0
    %v464 = vsel %vm405, %v297, 0
    %v467 = vsel %vm405, %v298, 0
    %v470 = vsel %vm405, %v299, 0
    %v473 = vsel %vm405, %v300, 0
    %v476 = vsel %vm405, %v301, 0
    %v479 = vsel %vm405, %v302, 0
    %v482 = vsel %vm405, %v303, 0
    %v485 = vsel %vm405, %v304, 0
    %v488 = vsel %vm405, %v305, 0
    %v491 = vsel %vm405, %v306, 0
    %v494 = vsel %vm405, %v307, 0
    %v497 = vsel %vm405, %v308, 0
    %v500 = vsel %vm405, %v309, 0
    %502 = vmatpush.xpose.msra.mxu0 %v500
    %503 = vmatpush.xpose.msra.mxu0 %v497
    %504 = vmatpush.xpose.msra.mxu0 %v494
    %505 = vmatpush.xpose.msra.mxu0 %v491
    %506 = vmatpush.xpose.msra.mxu0 %v488
    %507 = vmatpush.xpose.msra.mxu0 %v485
    %508 = vmatpush.xpose.msra.mxu0 %v482
    %509 = vmatpush.xpose.msra.mxu0 %v479
    %510 = vmatpush.xpose.msra.mxu0 %v476
    %511 = vmatpush.xpose.msra.mxu0 %v473
    %512 = vmatpush.xpose.msra.mxu0 %v470
    %513 = vmatpush.xpose.msra.mxu0 %v467
    %514 = vmatpush.xpose.msra.mxu0 %v464
    %515 = vmatpush.xpose.msra.mxu0 %v461
    %516 = vmatpush.xpose.msra.mxu0 %v458
    %517 = vmatpush.xpose.msra.mxu0 %v455
    %518 = vmatmul.f32.gmra.mxu0 %v407
    %v519 = vpop.f32.mrf.mxu0
    %v520 = vadd.f32 0.0, %v519
    %521 = vmatmul.f32.gmra.mxu0 %v410
    %v522 = vpop.f32.mrf.mxu0
    %v523 = vadd.f32 0.0, %v522
    %524 = vmatmul.f32.gmra.mxu0 %v413
    %v525 = vpop.f32.mrf.mxu0
    %v526 = vadd.f32 0.0, %v525
    %527 = vmatmul.f32.gmra.mxu0 %v416
    %v528 = vpop.f32.mrf.mxu0
    %v529 = vadd.f32 0.0, %v528
    %530 = vmatmul.f32.gmra.mxu0 %v419
    %v531 = vpop.f32.mrf.mxu0
    %v532 = vadd.f32 0.0, %v531
    %533 = vmatmul.f32.gmra.mxu0 %v422
    %v534 = vpop.f32.mrf.mxu0
    %v535 = vadd.f32 0.0, %v534
    %536 = vmatmul.f32.gmra.mxu0 %v425
    %v537 = vpop.f32.mrf.mxu0
    %v538 = vadd.f32 0.0, %v537
    %539 = vmatmul.f32.gmra.mxu0 %v428
    %v540 = vpop.f32.mrf.mxu0
    %v541 = vadd.f32 0.0, %v540
    %542 = vmatmul.f32.gmra.mxu0 %v431
    %v543 = vpop.f32.mrf.mxu0
    %v544 = vadd.f32 0.0, %v543
    %545 = vmatmul.f32.gmra.mxu0 %v434
    %v546 = vpop.f32.mrf.mxu0
    %v547 = vadd.f32 0.0, %v546
    %548 = vmatmul.f32.gmra.mxu0 %v437
    %v549 = vpop.f32.mrf.mxu0
    %v550 = vadd.f32 0.0, %v549
    %551 = vmatmul.f32.gmra.mxu0 %v440
    %v552 = vpop.f32.mrf.mxu0
    %v553 = vadd.f32 0.0, %v552
    %554 = vmatmul.f32.gmra.mxu0 %v443
    %v555 = vpop.f32.mrf.mxu0
    %v556 = vadd.f32 0.0, %v555
    %557 = vmatmul.f32.gmra.mxu0 %v446
    %v558 = vpop.f32.mrf.mxu0
    %v559 = vadd.f32 0.0, %v558
    %560 = vmatmul.f32.gmra.mxu0 %v449
    %v561 = vpop.f32.mrf.mxu0
    %v562 = vadd.f32 0.0, %v561
    %563 = vmatmul.f32.gmra.mxu0 %v452
    %v564 = vpop.f32.mrf.mxu0
    %v565 = vadd.f32 0.0, %v564
    %566 = vdwg.mxu0
    %v567 = vlaneseq
    %v568 = vand.u32 %v567, 127
    %vm569 = vcmp.ge.s32.totalorder %v568, 0
    %vm570 = vcmp.ge.s32.totalorder %v568, 64
    %vm571 = vcmp.lt.s32.totalorder %v568, 64
    %vm572 = vcmp.lt.s32.totalorder %v568, 128
    %vm573 = vmand %vm569, %vm571
    %vm574 = vmand %vm570, %vm572
    %v575 = vsel %vm573, %v520, -1e+30
    %v576 = vsel %vm573, %v523, -1e+30
    %v577 = vsel %vm573, %v526, -1e+30
    %v578 = vsel %vm573, %v529, -1e+30
    %v579 = vsel %vm573, %v532, -1e+30
    %v580 = vsel %vm573, %v535, -1e+30
    %v581 = vsel %vm573, %v538, -1e+30
    %v582 = vsel %vm573, %v541, -1e+30
    %v583 = vsel %vm574, %v544, -1e+30
    %v584 = vsel %vm574, %v547, -1e+30
    %v585 = vsel %vm574, %v550, -1e+30
    %v586 = vsel %vm574, %v553, -1e+30
    %v587 = vsel %vm574, %v556, -1e+30
    %v588 = vsel %vm574, %v559, -1e+30
    %v589 = vsel %vm574, %v562, -1e+30
    %v590 = vsel %vm574, %v565, -1e+30
    %591 = vmax.xlane.f32.xlu0 %v575
    %v592 = vpop.xlane.xlu0 %591
    %593 = vmax.xlane.f32.xlu0 %v576
    %v594 = vpop.xlane.xlu0 %593
    %595 = vmax.xlane.f32.xlu0 %v577
    %v596 = vpop.xlane.xlu0 %595
    %597 = vmax.xlane.f32.xlu0 %v578
    %v598 = vpop.xlane.xlu0 %597
    %599 = vmax.xlane.f32.xlu0 %v579
    %v600 = vpop.xlane.xlu0 %599
    %601 = vmax.xlane.f32.xlu0 %v580
    %v602 = vpop.xlane.xlu0 %601
    %603 = vmax.xlane.f32.xlu0 %v581
    %v604 = vpop.xlane.xlu0 %603
    %605 = vmax.xlane.f32.xlu0 %v582
    %v606 = vpop.xlane.xlu0 %605
    %607 = vmax.xlane.f32.xlu0 %v583
    %v608 = vpop.xlane.xlu0 %607
    %609 = vmax.xlane.f32.xlu0 %v584
    %v610 = vpop.xlane.xlu0 %609
    %611 = vmax.xlane.f32.xlu0 %v585
    %v612 = vpop.xlane.xlu0 %611
    %613 = vmax.xlane.f32.xlu0 %v586
    %v614 = vpop.xlane.xlu0 %613
    %615 = vmax.xlane.f32.xlu0 %v587
    %v616 = vpop.xlane.xlu0 %615
    %617 = vmax.xlane.f32.xlu0 %v588
    %v618 = vpop.xlane.xlu0 %617
    %619 = vmax.xlane.f32.xlu0 %v589
    %v620 = vpop.xlane.xlu0 %619
    %621 = vmax.xlane.f32.xlu0 %v590
    %v622 = vpop.xlane.xlu0 %621
    %v623 = vmax.f32 %v592, %v596
    %v624 = vmax.f32 %v594, %v598
    %v625 = vmax.f32 %v623, %v600
    %v626 = vmax.f32 %v624, %v602
    %v627 = vmax.f32 %v625, %v604
    %v628 = vmax.f32 %v626, %v606
    %v629 = vmax.f32 %v627, %v628
    %v630 = vrot.slane %v629, 4
    %v631 = vmax.f32 %v629, %v630
    %v632 = vrot.slane %v631, 2
    %v633 = vmax.f32 %v631, %v632
    %v634 = vrot.slane %v633, 1
    %v635 = vmax.f32 %v633, %v634
    %v636 = vmax.f32 %v608, %v612
    %v637 = vmax.f32 %v610, %v614
    %v638 = vmax.f32 %v636, %v616
    %v639 = vmax.f32 %v637, %v618
    %v640 = vmax.f32 %v638, %v620
    %v641 = vmax.f32 %v639, %v622
    %v642 = vmax.f32 %v640, %v641
    %v643 = vrot.slane %v642, 4
    %v644 = vmax.f32 %v642, %v643
    %v645 = vrot.slane %v644, 2
    %v646 = vmax.f32 %v644, %v645
    %v647 = vrot.slane %v646, 1
    %v648 = vmax.f32 %v646, %v647
    %v649 = vsub.f32 %v575, %v635
    %v650 = vsub.f32 %v576, %v635
    %v651 = vsub.f32 %v577, %v635
    %v652 = vsub.f32 %v578, %v635
    %v653 = vsub.f32 %v579, %v635
    %v654 = vsub.f32 %v580, %v635
    %v655 = vsub.f32 %v581, %v635
    %v656 = vsub.f32 %v582, %v635
    %v657 = vsub.f32 %v583, %v648
    %v658 = vsub.f32 %v584, %v648
    %v659 = vsub.f32 %v585, %v648
    %v660 = vsub.f32 %v586, %v648
    %v661 = vsub.f32 %v587, %v648
    %v662 = vsub.f32 %v588, %v648
    %v663 = vsub.f32 %v589, %v648
    %v664 = vsub.f32 %v590, %v648
    %v665 = vmul.f32 %v649, 1.442695
    %v666 = vpow.pop %v665
    %v667 = vmul.f32 %v650, 1.442695
    %v668 = vpow.pop %v667
    %v669 = vmul.f32 %v651, 1.442695
    %v670 = vpow.pop %v669
    %v671 = vmul.f32 %v652, 1.442695
    %v672 = vpow.pop %v671
    %v673 = vmul.f32 %v653, 1.442695
    %v674 = vpow.pop %v673
    %v675 = vmul.f32 %v654, 1.442695
    %v676 = vpow.pop %v675
    %v677 = vmul.f32 %v655, 1.442695
    %v678 = vpow.pop %v677
    %v679 = vmul.f32 %v656, 1.442695
    %v680 = vpow.pop %v679
    %v681 = vmul.f32 %v657, 1.442695
    %v682 = vpow.pop %v681
    %v683 = vmul.f32 %v658, 1.442695
    %v684 = vpow.pop %v683
    %v685 = vmul.f32 %v659, 1.442695
    %v686 = vpow.pop %v685
    %v687 = vmul.f32 %v660, 1.442695
    %v688 = vpow.pop %v687
    %v689 = vmul.f32 %v661, 1.442695
    %v690 = vpow.pop %v689
    %v691 = vmul.f32 %v662, 1.442695
    %v692 = vpow.pop %v691
    %v693 = vmul.f32 %v663, 1.442695
    %v694 = vpow.pop %v693
    %v695 = vmul.f32 %v664, 1.442695
    %v696 = vpow.pop %v695
    %697 = vadd.xlane.f32.xlu0 %v666
    %v698 = vpop.xlane.xlu0 %697
    %699 = vadd.xlane.f32.xlu0 %v668
    %v700 = vpop.xlane.xlu0 %699
    %701 = vadd.xlane.f32.xlu0 %v670
    %v702 = vpop.xlane.xlu0 %701
    %703 = vadd.xlane.f32.xlu0 %v672
    %v704 = vpop.xlane.xlu0 %703
    %705 = vadd.xlane.f32.xlu0 %v674
    %v706 = vpop.xlane.xlu0 %705
    %707 = vadd.xlane.f32.xlu0 %v676
    %v708 = vpop.xlane.xlu0 %707
    %709 = vadd.xlane.f32.xlu0 %v678
    %v710 = vpop.xlane.xlu0 %709
    %711 = vadd.xlane.f32.xlu0 %v680
    %v712 = vpop.xlane.xlu0 %711
    %713 = vadd.xlane.f32.xlu0 %v682
    %v714 = vpop.xlane.xlu0 %713
    %715 = vadd.xlane.f32.xlu0 %v684
    %v716 = vpop.xlane.xlu0 %715
    %717 = vadd.xlane.f32.xlu0 %v686
    %v718 = vpop.xlane.xlu0 %717
    %719 = vadd.xlane.f32.xlu0 %v688
    %v720 = vpop.xlane.xlu0 %719
    %721 = vadd.xlane.f32.xlu0 %v690
    %v722 = vpop.xlane.xlu0 %721
    %723 = vadd.xlane.f32.xlu0 %v692
    %v724 = vpop.xlane.xlu0 %723
    %725 = vadd.xlane.f32.xlu0 %v694
    %v726 = vpop.xlane.xlu0 %725
    %727 = vadd.xlane.f32.xlu0 %v696
    %v728 = vpop.xlane.xlu0 %727
    %v729 = vadd.f32 %v698, %v700
    %v730 = vadd.f32 %v729, %v702
    %v731 = vadd.f32 %v730, %v704
    %v732 = vadd.f32 %v731, %v706
    %v733 = vadd.f32 %v732, %v708
    %v734 = vadd.f32 %v733, %v710
    %v735 = vadd.f32 %v734, %v712
    %v736 = vrot.slane %v735, 4
    %v737 = vadd.f32 %v735, %v736
    %v738 = vrot.slane %v737, 2
    %v739 = vadd.f32 %v737, %v738
    %v740 = vrot.slane %v739, 1
    %v741 = vadd.f32 %v739, %v740
    %v742 = vadd.f32 %v714, %v716
    %v743 = vadd.f32 %v742, %v718
    %v744 = vadd.f32 %v743, %v720
    %v745 = vadd.f32 %v744, %v722
    %v746 = vadd.f32 %v745, %v724
    %v747 = vadd.f32 %v746, %v726
    %v748 = vadd.f32 %v747, %v728
    %v749 = vrot.slane %v748, 4
    %v750 = vadd.f32 %v748, %v749
    %v751 = vrot.slane %v750, 2
    %v752 = vadd.f32 %v750, %v751
    %v753 = vrot.slane %v752, 1
    %v754 = vadd.f32 %v752, %v753
    %v755 = vrcp.pop %v741
    %v756 = vmul.f32 %v741, %v755
    %v757 = vsub.f32 1.0, %v756
    %v758 = vmul.f32 %v755, %v757
    %v759 = vadd.f32 %v755, %v758
    %vm760 = vweird.f32 %v741
    %vm761 = vweird.f32 %v755
    %vm762 = vmor %vm760, %vm761
    %v763 = vsel %vm762, %v755, %v759
    %v764 = vand.u32 2147483647, %v741
    %vm765 = vcmp.eq.f32.partialorder %v764, 8.507059e+37
    %v766 = vand.u32 %v741, 2147483648
    %v767 = vor.u32 1.1754944e-38, %v766
    %v768 = vsel %vm765, %v767, %v763
    %v769 = vmul.f32 1.0, %v768
    %v770 = vrcp.pop %v754
    %v771 = vmul.f32 %v754, %v770
    %v772 = vsub.f32 1.0, %v771
    %v773 = vmul.f32 %v770, %v772
    %v774 = vadd.f32 %v770, %v773
    %vm775 = vweird.f32 %v754
    %vm776 = vweird.f32 %v770
    %vm777 = vmor %vm775, %vm776
    %v778 = vsel %vm777, %v770, %v774
    %v779 = vand.u32 2147483647, %v754
    %vm780 = vcmp.eq.f32.partialorder %v779, 8.507059e+37
    %v781 = vand.u32 %v754, 2147483648
    %v782 = vor.u32 1.1754944e-38, %v781
    %v783 = vsel %vm780, %v782, %v778
    %v784 = vmul.f32 1.0, %v783
    %v785 = vmul.f32 %v666, %v769
    %v786 = vmul.f32 %v668, %v769
    %v787 = vmul.f32 %v670, %v769
    %v788 = vmul.f32 %v672, %v769
    %v789 = vmul.f32 %v674, %v769
    %v790 = vmul.f32 %v676, %v769
    %v791 = vmul.f32 %v678, %v769
    %v792 = vmul.f32 %v680, %v769
    %v793 = vmul.f32 %v682, %v784
    %v794 = vmul.f32 %v684, %v784
    %v795 = vmul.f32 %v686, %v784
    %v796 = vmul.f32 %v688, %v784
    %v797 = vmul.f32 %v690, %v784
    %v798 = vmul.f32 %v692, %v784
    %v799 = vmul.f32 %v694, %v784
    %v800 = vmul.f32 %v696, %v784
    %801 = vmatpush.xpose.msra.mxu0 %v800
    %802 = vmatpush.xpose.msra.mxu0 %v799
    %803 = vmatpush.xpose.msra.mxu0 %v798
    %804 = vmatpush.xpose.msra.mxu0 %v797
    %805 = vmatpush.xpose.msra.mxu0 %v796
    %806 = vmatpush.xpose.msra.mxu0 %v795
    %807 = vmatpush.xpose.msra.mxu0 %v794
    %808 = vmatpush.xpose.msra.mxu0 %v793
    %809 = vmatpush.xpose.msra.mxu0 %v792
    %810 = vmatpush.xpose.msra.mxu0 %v791
    %811 = vmatpush.xpose.msra.mxu0 %v790
    %812 = vmatpush.xpose.msra.mxu0 %v789
    %813 = vmatpush.xpose.msra.mxu0 %v788
    %814 = vmatpush.xpose.msra.mxu0 %v787
    %815 = vmatpush.xpose.msra.mxu0 %v786
    %816 = vmatpush.xpose.msra.mxu0 %v785
    %817 = vmatmul.f32.gmra.mxu0 %v403
    %v818 = vpop.f32.mrf.mxu0
    %v819 = vadd.f32 0.0, %v818
    %820 = vmatmul.f32.gmra.mxu0 %v404
    %v821 = vpop.f32.mrf.mxu0
    %v822 = vadd.f32 0.0, %v821
    %823 = vdwg.mxu0
    %824 = vst [vmem:[#allocation2] sm:$0xff] %v358
    %825 = vst [vmem:[#allocation2 + $0x8] sm:$0xff] %v359
    %826 = vst [vmem:[#allocation2 + $0x10] sm:$0xff] %v819
    %827 = vst [vmem:[#allocation2 + $0x18] sm:$0xff] %v822
    // Predicated region
    $region34: #{tpu_custom_call.1} parent=1 // pred_check
      _
    $region35: #{tpu_custom_call.1} parent=1 // pred_check_branch
      %829 = sbr.rel (0) target = $region37
    $region36: #{tpu_custom_call.1} parent=1 // pred_region
      %831 = vsyncadd [#allocation3], 0
      %s832 = sshll.u32 [#allocation2], 4
      %s833 = int_to_ptr.vmem [resolvable:$true] %s832
      %s834 = sshll.u32 %s8, 4
      %s835 = int_to_ptr.hbm [resolvable:$true] %s834
      %840 = dma.vmem_to_hbm [thread:$0]  %s833, 512, %s835, [#allocation3], 128, 128, 8
    $region37: #{tpu_custom_call.1} parent=1 // pred_fallthru
      _
    // Predicated region
    $region38: #{tpu_custom_call.1} parent=1 // pred_check
      _
    $region39: #{tpu_custom_call.1} parent=1 // pred_check_branch
      %842 = sbr.rel (0) target = $region41
    $region40: #{tpu_custom_call.1} parent=1 // pred_region
      %844 = dma.done [#allocation3], 512
    $region41: #{tpu_custom_call.1} parent=1 // pred_fallthru
      _
    %845 = vsyncpa [#allocation3], 1

</llo_original>
